<compile_context>
chip_gen: v7x
topology: tpu7x:2x2x1
jax: 0.10.0
libtpu: 0.0.40
codegen_flags: <defaults>
</compile_context>

<pallas_src>
import jax
import jax.numpy as jnp
from jax import lax
from jax.experimental import pallas as pl
from jax.experimental.pallas import tpu as pltpu

# Synthetic env sizes (module's __init__ only needs these two ints).
N_STATES = 8      # env.observation_space.shape[0]
N_ACTIONS = 4     # env.action_space.n
HIDDEN = 50

# TPU-friendly padded sizes.
H_PAD = 128       # hidden 50 -> 128 lanes
A_PAD = 8         # actions 4 -> 8 sublanes (f32 sublane count)
LANE = 128        # lane width; batch is padded to a multiple of this

GRIDLESS_MAX_ROWS = 4096   # above this, switch to the gridded path
GRID_BLOCK_ROWS = 2048     # batch rows per grid step on the gridded path


def dqn_kernel(x_ref, w1_ref, b1_ref, w2_ref, b2_ref, out_ref):
    """Fused 2-layer MLP; emits Q^T (A_PAD, rows) so the store is lane-dense."""
    x = x_ref[...].astype(jnp.bfloat16)                       # (rows, N_STATES)
    h = jnp.dot(x, w1_ref[...],
                preferred_element_type=jnp.float32)           # (rows, H_PAD) f32
    h = jnp.maximum(h + b1_ref[...], 0.0)                     # bias+ReLU in f32
    # Q^T[a, b] = sum_h w2[a, h] * h[b, h]  (A @ B.T on the MXU; no materialized
    # transpose, and the (A_PAD, rows) result keeps the batch on the lane axis).
    q_t = lax.dot_general(
        w2_ref[...], h.astype(jnp.bfloat16),
        dimension_numbers=(((1,), (1,)), ((), ())),
        preferred_element_type=jnp.float32)                   # (A_PAD, rows)
    out_ref[...] = (q_t + b2_ref[...]).astype(out_ref.dtype)


def _round_up(n, m):
    return ((n + m - 1) // m) * m


def dqn_forward_padded(x, params, *, block_rows=None):
    """x: (B, N_STATES) f32.  Returns Q^T of shape (A_PAD, Bp) f32; live data is
    [:N_ACTIONS, :B].  Hot-path callers (argmax action selection, TD targets)
    should consume this slab directly instead of slicing it back out."""
    w1p, b1p, w2p, b2p = params
    B = x.shape[0]

    if block_rows is None and B > GRIDLESS_MAX_ROWS:
        block_rows = GRID_BLOCK_ROWS

    if not block_rows:
        # Gridless fast path: everything resident in VMEM, single fused pass.
        Bp = _round_up(B, LANE)
        if Bp != B:
            x = jnp.pad(x, ((0, Bp - B), (0, 0)))
        vmem = lambda: pl.BlockSpec(memory_space=pltpu.MemorySpace.VMEM)
        return pl.pallas_call(
            dqn_kernel,
            out_shape=jax.ShapeDtypeStruct((A_PAD, Bp), jnp.float32),
            in_specs=[vmem() for _ in range(5)],
            out_specs=vmem(),
        )(x, w1p, b1p, w2p, b2p)

    # Gridded path for large batches: 1-D parallel grid over batch rows so VMEM
    # stays bounded (v7x 64 MiB / v5e 16 MiB scoped) and both v7x TCs are used.
    assert block_rows % LANE == 0, "block_rows must be a multiple of 128"
    Bp = _round_up(B, block_rows)
    if Bp != B:
        x = jnp.pad(x, ((0, Bp - B), (0, 0)))
    grid = (Bp // block_rows,)
    return pl.pallas_call(
        dqn_kernel,
        out_shape=jax.ShapeDtypeStruct((A_PAD, Bp), jnp.float32),
        grid_spec=pltpu.PrefetchScalarGridSpec(
            num_scalar_prefetch=0,
            grid=grid,
            in_specs=[
                pl.BlockSpec((block_rows, N_STATES), lambda i: (i, 0)),  # x
                pl.BlockSpec((N_STATES, H_PAD), lambda i: (0, 0)),       # w1
                pl.BlockSpec((1, H_PAD), lambda i: (0, 0)),              # b1
                pl.BlockSpec((A_PAD, H_PAD), lambda i: (0, 0)),          # w2
                pl.BlockSpec((A_PAD, 1), lambda i: (0, 0)),              # b2
            ],
            out_specs=pl.BlockSpec((A_PAD, block_rows), lambda i: (0, i)),
        ),
        compiler_params=pltpu.CompilerParams(
            dimension_semantics=("parallel",)),
    )(x, w1p, b1p, w2p, b2p)


def dqn_forward(x, params, **kwargs):
    """Convenience wrapper returning (B, N_ACTIONS) like the PyTorch module.
    (The slice/transpose here touches only the 4 live rows of the tiny slab.)"""
    q_t = dqn_forward_padded(x, params, **kwargs)
    return q_t[:N_ACTIONS, :x.shape[0]].T


def init_params(key):
    # PyTorch port: weight.data.normal_(0, 0.1); bias keeps nn.Linear's default
    # uniform(-1/sqrt(fan_in), 1/sqrt(fan_in)) init.
    k1, k2, k3, k4 = jax.random.split(key, 4)
    w1 = 0.1 * jax.random.normal(k1, (HIDDEN, N_STATES), dtype=jnp.float32)
    b1 = jax.random.uniform(k2, (HIDDEN,), jnp.float32,
                            -1.0 / N_STATES ** 0.5, 1.0 / N_STATES ** 0.5)
    w2 = 0.1 * jax.random.normal(k3, (N_ACTIONS, HIDDEN), dtype=jnp.float32)
    b2 = jax.random.uniform(k4, (N_ACTIONS,), jnp.float32,
                            -1.0 / HIDDEN ** 0.5, 1.0 / HIDDEN ** 0.5)
    return w1, b1, w2, b2


def pad_params(w1, b1, w2, b2):
    """One-time build-time padding to TPU-friendly layouts (bf16 weights)."""
    w1p = jnp.zeros((N_STATES, H_PAD), jnp.bfloat16).at[:, :HIDDEN].set(
        w1.T.astype(jnp.bfloat16))                         # (8, 128)   ~2 KB
    b1p = jnp.zeros((1, H_PAD), jnp.float32).at[0, :HIDDEN].set(b1)
    w2p = jnp.zeros((A_PAD, H_PAD), jnp.bfloat16).at[:N_ACTIONS, :HIDDEN].set(
        w2.astype(jnp.bfloat16))                           # (8, 128)   ~2 KB
    b2p = jnp.zeros((A_PAD, 1), jnp.float32).at[:N_ACTIONS, 0].set(b2)
    return w1p, b1p, w2p, b2p


def reference_forward(x, w1, b1, w2, b2):
    h = jnp.maximum(x @ w1.T + b1, 0.0)
    return h @ w2.T + b2


def reference_forward_bf16(x, w1, b1, w2, b2):
    # Emulates the kernel's bf16 matmul operands with f32 accumulation.
    h = jnp.dot(x.astype(jnp.bfloat16), w1.T.astype(jnp.bfloat16),
                preferred_element_type=jnp.float32) + b1
    h = jnp.maximum(h, 0.0)
    return jnp.dot(h.astype(jnp.bfloat16), w2.T.astype(jnp.bfloat16),
                   preferred_element_type=jnp.float32) + b2


if __name__ == "__main__":
    key = jax.random.PRNGKey(0)
    kx, kp = jax.random.split(key)
    w1, b1, w2, b2 = init_params(kp)
    params = pad_params(w1, b1, w2, b2)

    def check(batch, block_rows=None):
        x = jax.random.normal(jax.random.fold_in(kx, batch),
                              (batch, N_STATES), dtype=jnp.float32)
        out = jax.block_until_ready(dqn_forward(x, params, block_rows=block_rows))
        assert out.shape == (batch, N_ACTIONS)
        ref_b = reference_forward_bf16(x, w1, b1, w2, b2)
        ref_f = reference_forward(x, w1, b1, w2, b2)
        assert jnp.allclose(out, ref_b, atol=1e-3, rtol=1e-3), \
            f"mismatch vs bf16-emulating reference (B={batch})"
        assert jnp.allclose(out, ref_f, atol=5e-2, rtol=5e-2), \
            f"mismatch vs f32 reference (B={batch})"

    check(2)                       # gridless path, typical action-selection batch
    check(37)                      # gridless path, non-multiple-of-8 replay batch
    check(300, block_rows=128)     # force the gridded large-batch path (grid = 3)

    print("KERNEL_OK")
</pallas_src>

<mosaic_0001>
module attributes {stable_mosaic.version = 11 : i64} {
  func.func @dqn_kernel(%arg0: memref<128x8xf32, #tpu.memory_space<vmem>>, %arg1: memref<8x128xbf16, #tpu.memory_space<vmem>>, %arg2: memref<1x128xf32, #tpu.memory_space<vmem>>, %arg3: memref<8x128xbf16, #tpu.memory_space<vmem>>, %arg4: memref<8x1xf32, #tpu.memory_space<vmem>>, %arg5: memref<8x128xf32, #tpu.memory_space<vmem>>) attributes {dimension_semantics = [], scalar_prefetch = 0 : i64, scratch_operands = 0 : i64, tpu.core_type = #tpu.core_type<tc>} {
    %c0 = arith.constant 0 : index
    %c0_0 = arith.constant 0 : index
    %0 = vector.load %arg0[%c0, %c0_0] : memref<128x8xf32, #tpu.memory_space<vmem>>, vector<128x8xf32>
    %1 = arith.truncf %0 : vector<128x8xf32> to vector<128x8xbf16>
    %c0_1 = arith.constant 0 : index
    %c0_2 = arith.constant 0 : index
    %2 = vector.load %arg1[%c0_1, %c0_2] : memref<8x128xbf16, #tpu.memory_space<vmem>>, vector<8x128xbf16>
    %cst = arith.constant dense<0.000000e+00> : vector<128x128xf32>
    %3 = tpu.matmul %1, %2, %cst {dimension_numbers = #tpu.dot_dimension_numbers<[1], [0], [0], [1], [0, 0, 1, 1], [], []>} : vector<128x8xbf16>, vector<8x128xbf16>, vector<128x128xf32> -> vector<128x128xf32>
    %c0_3 = arith.constant 0 : index
    %c0_4 = arith.constant 0 : index
    %4 = vector.load %arg2[%c0_3, %c0_4] : memref<1x128xf32, #tpu.memory_space<vmem>>, vector<1x128xf32>
    %5 = vector.broadcast %4 : vector<1x128xf32> to vector<128x128xf32>
    %6 = arith.addf %3, %5 : vector<128x128xf32>
    %cst_5 = arith.constant 0.000000e+00 : f32
    %7 = vector.broadcast %cst_5 : f32 to vector<128x128xf32>
    %8 = arith.maximumf %6, %7 : vector<128x128xf32>
    %c0_6 = arith.constant 0 : index
    %c0_7 = arith.constant 0 : index
    %9 = vector.load %arg3[%c0_6, %c0_7] : memref<8x128xbf16, #tpu.memory_space<vmem>>, vector<8x128xbf16>
    %10 = arith.truncf %8 : vector<128x128xf32> to vector<128x128xbf16>
    %cst_8 = arith.constant dense<0.000000e+00> : vector<8x128xf32>
    %11 = tpu.matmul %9, %10, %cst_8 {dimension_numbers = #tpu.dot_dimension_numbers<[1], [1], [0], [0], [0, 0, 1, 0], [], []>} : vector<8x128xbf16>, vector<128x128xbf16>, vector<8x128xf32> -> vector<8x128xf32>
    %c0_9 = arith.constant 0 : index
    %c0_10 = arith.constant 0 : index
    %12 = vector.load %arg4[%c0_9, %c0_10] : memref<8x1xf32, #tpu.memory_space<vmem>>, vector<8x1xf32>
    %13 = vector.broadcast %12 : vector<8x1xf32> to vector<8x128xf32>
    %14 = arith.addf %11, %13 : vector<8x128xf32>
    %c0_11 = arith.constant 0 : index
    %c0_12 = arith.constant 0 : index
    %15 = vector.load %arg5[%c0_11, %c0_12] : memref<8x128xf32, #tpu.memory_space<vmem>>, vector<8x128xf32>
    tpu.vector_store %arg5[%c0_11, %c0_12], %14 {strides = array<i32>} : memref<8x128xf32, #tpu.memory_space<vmem>>, vector<8x128xf32>,
    return
  }
}

</mosaic_0001>

<llo_original>
// kernel: tpu_custom_call.1
$region0: #{tpu_custom_call.1}
  #allocation0 [shape = 'u32[]', space=smem, size = 0x4, offset = 0x4, fixed_abs, tag = 'smem constant byte address 0x4 - core index']
  #allocation1 [shape = 'u32[144,128]{1,0:T(1,128)}', space=vmem, size = 0x12000, scoped, tag = 'internal scratch']
  %s0 = inlined_call_operand.vmem [shape: f32[128,8], index: 0, kind: input, shape index: {}]
  %s1 = inlined_call_operand.vmem [shape: bf16[8,128], index: 1, kind: input, shape index: {}]
  %s2 = inlined_call_operand.vmem [shape: f32[1,128], index: 2, kind: input, shape index: {}]
  %s3 = inlined_call_operand.vmem [shape: bf16[8,128], index: 3, kind: input, shape index: {}]
  %s4 = inlined_call_operand.vmem [shape: f32[8,1], index: 4, kind: input, shape index: {}]
  %s5 = inlined_call_operand.hbm [shape: f32[8,128], index: 5, kind: output, shape index: {}]
  %s6 = sld [smem:[#allocation0]]
  $region30: #{tpu_custom_call.1} parent=0
    _
  %s8 = ssub.s32 1, %s6
  %s9 = scalar_select 0, %s8, %s6
  $region1: #{tpu_custom_call.1} parent=0
    #allocation2 [shape = 'u8[4096]{0}', space=vmem, size = 0x1000, scoped, tag = 'output window, operand 0, single buffered']
    #allocation3 [shape = 's32[1]{0}', space=sflag, size = 0x4, scoped, tag = 'scoped memory for tpu_custom_call.1']
    %10 = vsyncpa [#allocation3], 0
    // Predicated region
    $region2: #{tpu_custom_call.1} parent=1 // pred_check
      _
    $region3: #{tpu_custom_call.1} parent=1 // pred_check_branch
      %12 = sbr.rel (0) target = $region5
    $region4: #{tpu_custom_call.1} parent=1 // pred_region
      _
    $region5: #{tpu_custom_call.1} parent=1 // pred_fallthru
      _
    // Predicated region
    $region6: #{tpu_custom_call.1} parent=1 // pred_check
      _
    $region7: #{tpu_custom_call.1} parent=1 // pred_check_branch
      %14 = sbr.rel (0) target = $region9
    $region8: #{tpu_custom_call.1} parent=1 // pred_region
      _
    $region9: #{tpu_custom_call.1} parent=1 // pred_fallthru
      _
    // Predicated region
    $region10: #{tpu_custom_call.1} parent=1 // pred_check
      _
    $region11: #{tpu_custom_call.1} parent=1 // pred_check_branch
      %16 = sbr.rel (0) target = $region13
    $region12: #{tpu_custom_call.1} parent=1 // pred_region
      _
    $region13: #{tpu_custom_call.1} parent=1 // pred_fallthru
      _
    // Predicated region
    $region14: #{tpu_custom_call.1} parent=1 // pred_check
      _
    $region15: #{tpu_custom_call.1} parent=1 // pred_check_branch
      %18 = sbr.rel (0) target = $region17
    $region16: #{tpu_custom_call.1} parent=1 // pred_region
      _
    $region17: #{tpu_custom_call.1} parent=1 // pred_fallthru
      _
    // Predicated region
    $region18: #{tpu_custom_call.1} parent=1 // pred_check
      _
    $region19: #{tpu_custom_call.1} parent=1 // pred_check_branch
      %20 = sbr.rel (0) target = $region21
    $region20: #{tpu_custom_call.1} parent=1 // pred_region
      _
    $region21: #{tpu_custom_call.1} parent=1 // pred_fallthru
      _
    %v22 = vld [vmem:[%s0] sm:$0xff]
    %v23 = vld [vmem:[%s0 + $0x8] sm:$0xff]
    %v24 = vld [vmem:[%s0 + $0x10] sm:$0xff]
    %v25 = vld [vmem:[%s0 + $0x18] sm:$0xff]
    %v26 = vld [vmem:[%s0 + $0x20] sm:$0xff]
    %v27 = vld [vmem:[%s0 + $0x28] sm:$0xff]
    %v28 = vld [vmem:[%s0 + $0x30] sm:$0xff]
    %v29 = vld [vmem:[%s0 + $0x38] sm:$0xff]
    %v30 = vld [vmem:[%s0 + $0x40] sm:$0xff]
    %v31 = vld [vmem:[%s0 + $0x48] sm:$0xff]
    %v32 = vld [vmem:[%s0 + $0x50] sm:$0xff]
    %v33 = vld [vmem:[%s0 + $0x58] sm:$0xff]
    %v34 = vld [vmem:[%s0 + $0x60] sm:$0xff]
    %v35 = vld [vmem:[%s0 + $0x68] sm:$0xff]
    %v36 = vld [vmem:[%s0 + $0x70] sm:$0xff]
    %v37 = vld [vmem:[%s0 + $0x78] sm:$0xff]
    %v38 = vpack.c.bf16 %v23, %v22
    %v39 = vpack.c.bf16 %v25, %v24
    %v40 = vpack.c.bf16 %v27, %v26
    %v41 = vpack.c.bf16 %v29, %v28
    %v42 = vpack.c.bf16 %v31, %v30
    %v43 = vpack.c.bf16 %v33, %v32
    %v44 = vpack.c.bf16 %v35, %v34
    %v45 = vpack.c.bf16 %v37, %v36
    %v46 = vld [vmem:[%s1] sm:$0xf]
    %v47 = vld [vmem:[%s2] sm:$0x1]
    %v49 = vlaneseq
    %v50 = vshrl.u32 %v49, 7
    %v51 = vsub.s32 0, %v50
    %v52 = vrot.slane %v47, %v51
    %vm54 = vcmask 64512
    %v56 = vsel %vm54, %v38, 0
    %v59 = vsel %vm54, %v39, 0
    %v62 = vsel %vm54, %v40, 0
    %v65 = vsel %vm54, %v41, 0
    %v68 = vsel %vm54, %v42, 0
    %v71 = vsel %vm54, %v43, 0
    %v74 = vsel %vm54, %v44, 0
    %v77 = vsel %vm54, %v45, 0
    %vm79 = vcmask 1043456
    %v81 = vsel %vm79, %v46, 0
    %83 = vmatprep.subr.bf16.mxu0 0
    %84 = vmatpush1.bf16.msra.mxu0 %v81
    %85 = vmatprep.subr.bf16.mxu0 0
    %86 = vmatpush1.bf16.msra.mxu0 0
    %87 = vmatprep.subr.bf16.mxu0 0
    %88 = vmatpush1.bf16.msra.mxu0 0
    %89 = vmatprep.subr.bf16.mxu0 0
    %90 = vmatpush1.bf16.msra.mxu0 0
    %91 = vmatprep.subr.bf16.mxu0 0
    %92 = vmatpush1.bf16.msra.mxu0 0
    %93 = vmatprep.subr.bf16.mxu0 0
    %94 = vmatpush1.bf16.msra.mxu0 0
    %95 = vmatprep.subr.bf16.mxu0 0
    %96 = vmatpush1.bf16.msra.mxu0 0
    %97 = vmatprep.subr.bf16.mxu0 0
    %98 = vmatpush1.bf16.msra.mxu0 0
    %99 = vmatprep.subr.bf16.mxu0 0
    %100 = vmatpush1.bf16.msra.mxu0 0
    %101 = vmatprep.subr.bf16.mxu0 0
    %102 = vmatpush1.bf16.msra.mxu0 0
    %103 = vmatprep.subr.bf16.mxu0 0
    %104 = vmatpush1.bf16.msra.mxu0 0
    %105 = vmatprep.subr.bf16.mxu0 0
    %106 = vmatpush1.bf16.msra.mxu0 0
    %107 = vmatprep.subr.bf16.mxu0 0
    %108 = vmatpush1.bf16.msra.mxu0 0
    %109 = vmatprep.subr.bf16.mxu0 0
    %110 = vmatpush1.bf16.msra.mxu0 0
    %111 = vmatprep.subr.bf16.mxu0 0
    %112 = vmatpush1.bf16.msra.mxu0 0
    %113 = vmatprep.subr.bf16.mxu0 0
    %114 = vmatpush1.bf16.msra.mxu0 0
    %115 = vmatprep.mubr.bf16.mxu0 0
    %116 = vmatmul.mubr.bf16.gmra.mrb[0].mxu0 %v56
    %v117 = vpop.f32.mrb[0].mxu0
    %v118 = vadd.f32 %v52, %v117
    %v119 = vpop.f32.mrb[0].mxu0
    %v120 = vpop.f32.mrb[0].mxu0
    %v121 = vadd.f32 %v52, %v120
    %v122 = vpop.f32.mrb[0].mxu0
    %123 = vmatprep.mubr.bf16.mxu0 0
    %124 = vmatmul.mubr.bf16.gmra.mrb[0].mxu0 %v59
    %v125 = vpop.f32.mrb[0].mxu0
    %v126 = vadd.f32 %v52, %v125
    %v127 = vpop.f32.mrb[0].mxu0
    %v128 = vpop.f32.mrb[0].mxu0
    %v129 = vadd.f32 %v52, %v128
    %v130 = vpop.f32.mrb[0].mxu0
    %131 = vmatprep.mubr.bf16.mxu0 0
    %132 = vmatmul.mubr.bf16.gmra.mrb[0].mxu0 %v62
    %v133 = vpop.f32.mrb[0].mxu0
    %v134 = vadd.f32 %v52, %v133
    %v135 = vpop.f32.mrb[0].mxu0
    %v136 = vpop.f32.mrb[0].mxu0
    %v137 = vadd.f32 %v52, %v136
    %v138 = vpop.f32.mrb[0].mxu0
    %139 = vmatprep.mubr.bf16.mxu0 0
    %140 = vmatmul.mubr.bf16.gmra.mrb[0].mxu0 %v65
    %v141 = vpop.f32.mrb[0].mxu0
    %v142 = vadd.f32 %v52, %v141
    %v143 = vpop.f32.mrb[0].mxu0
    %v144 = vpop.f32.mrb[0].mxu0
    %v145 = vadd.f32 %v52, %v144
    %v146 = vpop.f32.mrb[0].mxu0
    %147 = vmatprep.mubr.bf16.mxu0 0
    %148 = vmatmul.mubr.bf16.gmra.mrb[0].mxu0 %v68
    %v149 = vpop.f32.mrb[0].mxu0
    %v150 = vadd.f32 %v52, %v149
    %v151 = vpop.f32.mrb[0].mxu0
    %v152 = vpop.f32.mrb[0].mxu0
    %v153 = vadd.f32 %v52, %v152
    %v154 = vpop.f32.mrb[0].mxu0
    %155 = vmatprep.mubr.bf16.mxu0 0
    %156 = vmatmul.mubr.bf16.gmra.mrb[0].mxu0 %v71
    %v157 = vpop.f32.mrb[0].mxu0
    %v158 = vadd.f32 %v52, %v157
    %v159 = vpop.f32.mrb[0].mxu0
    %v160 = vpop.f32.mrb[0].mxu0
    %v161 = vadd.f32 %v52, %v160
    %v162 = vpop.f32.mrb[0].mxu0
    %163 = vmatprep.mubr.bf16.mxu0 0
    %164 = vmatmul.mubr.bf16.gmra.mrb[0].mxu0 %v74
    %v165 = vpop.f32.mrb[0].mxu0
    %v166 = vadd.f32 %v52, %v165
    %v167 = vpop.f32.mrb[0].mxu0
    %v168 = vpop.f32.mrb[0].mxu0
    %v169 = vadd.f32 %v52, %v168
    %v170 = vpop.f32.mrb[0].mxu0
    %171 = vmatprep.mubr.bf16.mxu0 0
    %172 = vmatmul.mubr.bf16.gmra.mrb[0].mxu0 %v77
    %v173 = vpop.f32.mrb[0].mxu0
    %v174 = vadd.f32 %v52, %v173
    %v175 = vpop.f32.mrb[0].mxu0
    %v176 = vpop.f32.mrb[0].mxu0
    %v177 = vadd.f32 %v52, %v176
    %v178 = vpop.f32.mrb[0].mxu0
    %179 = vdwg.mxu0
    %v180 = vmax.f32 %v118, 0.0
    %v181 = vmax.f32 %v121, 0.0
    %v182 = vmax.f32 %v126, 0.0
    %v183 = vmax.f32 %v129, 0.0
    %v184 = vmax.f32 %v134, 0.0
    %v185 = vmax.f32 %v137, 0.0
    %v186 = vmax.f32 %v142, 0.0
    %v187 = vmax.f32 %v145, 0.0
    %v188 = vmax.f32 %v150, 0.0
    %v189 = vmax.f32 %v153, 0.0
    %v190 = vmax.f32 %v158, 0.0
    %v191 = vmax.f32 %v161, 0.0
    %v192 = vmax.f32 %v166, 0.0
    %v193 = vmax.f32 %v169, 0.0
    %v194 = vmax.f32 %v174, 0.0
    %v195 = vmax.f32 %v177, 0.0
    %v196 = vld [vmem:[%s3] sm:$0xf]
    %v197 = vpack.c.bf16 %v181, %v180
    %v198 = vpack.c.bf16 %v183, %v182
    %v199 = vpack.c.bf16 %v185, %v184
    %v200 = vpack.c.bf16 %v187, %v186
    %v201 = vpack.c.bf16 %v189, %v188
    %v202 = vpack.c.bf16 %v191, %v190
    %v203 = vpack.c.bf16 %v193, %v192
    %v204 = vpack.c.bf16 %v195, %v194
    %v205 = vld [vmem:[%s4] sm:$0xff]
    %207 = vset.pattern.permute.xlu0 0
    %208 = vperm.xlu0 %207, %v205
    %v209 = vpop.permute.xlu0 %208
    %211 = vmatprep.subr.bf16.mxu0 0
    %212 = vmatpush1.bf16.xpose.msra.mxu0 %v197
    %213 = vmatprep.subr.bf16.mxu0 0
    %214 = vmatpush1.bf16.xpose.msra.mxu0 %v198
    %215 = vmatprep.subr.bf16.mxu0 0
    %216 = vmatpush1.bf16.xpose.msra.mxu0 %v199
    %217 = vmatprep.subr.bf16.mxu0 0
    %218 = vmatpush1.bf16.xpose.msra.mxu0 %v200
    %219 = vmatprep.subr.bf16.mxu0 0
    %220 = vmatpush1.bf16.xpose.msra.mxu0 %v201
    %221 = vmatprep.subr.bf16.mxu0 0
    %222 = vmatpush1.bf16.xpose.msra.mxu0 %v202
    %223 = vmatprep.subr.bf16.mxu0 0
    %224 = vmatpush1.bf16.xpose.msra.mxu0 %v203
    %225 = vmatprep.subr.bf16.mxu0 0
    %226 = vmatpush1.bf16.xpose.msra.mxu0 %v204
    %227 = vmatprep.subr.bf16.mxu0 0
    %228 = vmatpush1.bf16.xpose.msra.mxu0 0
    %229 = vmatprep.subr.bf16.mxu0 0
    %230 = vmatpush1.bf16.xpose.msra.mxu0 0
    %231 = vmatprep.subr.bf16.mxu0 0
    %232 = vmatpush1.bf16.xpose.msra.mxu0 0
    %233 = vmatprep.subr.bf16.mxu0 0
    %234 = vmatpush1.bf16.xpose.msra.mxu0 0
    %235 = vmatprep.subr.bf16.mxu0 0
    %236 = vmatpush1.bf16.xpose.msra.mxu0 0
    %237 = vmatprep.subr.bf16.mxu0 0
    %238 = vmatpush1.bf16.xpose.msra.mxu0 0
    %239 = vmatprep.subr.bf16.mxu0 0
    %240 = vmatpush1.bf16.xpose.msra.mxu0 0
    %241 = vmatprep.subr.bf16.mxu0 0
    %242 = vmatpush1.bf16.xpose.msra.mxu0 0
    %243 = vmatprep.mubr.bf16.mxu0 0
    %244 = vmatmul.mubr.bf16.gmra.mrb[0].mxu0 %v196
    %v245 = vpop.f32.mrb[0].mxu0
    %v246 = vadd.f32 %v209, %v245
    %v247 = vpop.f32.mrb[0].mxu0
    %v248 = vpop.f32.mrb[0].mxu0
    %v249 = vpop.f32.mrb[0].mxu0
    %250 = vdwg.mxu0
    %251 = vst [vmem:[#allocation2] sm:$0xff] %v246
    // Predicated region
    $region22: #{tpu_custom_call.1} parent=1 // pred_check
      _
    $region23: #{tpu_custom_call.1} parent=1 // pred_check_branch
      %253 = sbr.rel (0) target = $region25
    $region24: #{tpu_custom_call.1} parent=1 // pred_region
      %s255 = ssub.s32 128, 128
      %256 = vsyncadd [#allocation3], %s255
      %s258 = sshll.u32 [#allocation2], 4
      %s259 = int_to_ptr.vmem [resolvable:$true] %s258
      %261 = dma.vmem_to_hbm [thread:$0]  %s259, 128, %s5, [#allocation3]
    $region25: #{tpu_custom_call.1} parent=1 // pred_fallthru
      _
    // Predicated region
    $region26: #{tpu_custom_call.1} parent=1 // pred_check
      _
    $region27: #{tpu_custom_call.1} parent=1 // pred_check_branch
      %263 = sbr.rel (0) target = $region29
    $region28: #{tpu_custom_call.1} parent=1 // pred_region
      %264 = dma.done [#allocation3], 128
    $region29: #{tpu_custom_call.1} parent=1 // pred_fallthru
      _
    %265 = vsyncpa [#allocation3], 1

</llo_original>
